<compile_context>
chip_gen: v5e
topology: v5e:2x2
jax: 0.10.0
libtpu: 0.0.40
codegen_flags: <defaults>
</compile_context>

<pallas_src>
import functools

import jax
import jax.numpy as jnp
from jax.experimental import pallas as pl
from jax.experimental.pallas import tpu as pltpu

_LANE = 128
_SUB = 16  # block-row granularity: multiple of 8 (f32 sublane) and 16 (bf16 packing)


def _wmse_kernel(x_ref, t_ref, o_ref, *, weight_for_white, block_rows, rows,
                 blocks_per_split, may_need_mask):
    c = pl.program_id(0)  # split axis (parallel / core-parallel)
    i = pl.program_id(1)  # reduction axis ("arbitrary")

    @pl.when(i == 0)
    def _():
        o_ref[...] = jnp.zeros_like(o_ref)

    x = x_ref[...].astype(jnp.float32)
    t = t_ref[...].astype(jnp.float32)

    # weights = ones_like(target) + target * (weight_for_white - 1)
    w = 1.0 + t * (weight_for_white - 1.0)
    wse = (x - t) ** 2 * w

    def _accumulate(v):
        # Sublane-aligned partial reduce (pure VPU adds); cross-lane reduce is
        # deferred to the wrapper.
        o_ref[...] += v.reshape(block_rows // 8, 8, _LANE).sum(axis=0)

    if may_need_mask:
        blk = c * blocks_per_split + i
        is_ragged = (blk + 1) * block_rows > rows  # also true for clamped dup blocks

        @pl.when(is_ragged)
        def _():
            # Mask rows past the real data using the LOGICAL block index, so
            # clamped re-read blocks contribute exactly zero and partial-block
            # garbage is replaced (not multiplied) away.
            row_ids = blk * block_rows + jax.lax.broadcasted_iota(
                jnp.int32, wse.shape, 0)
            _accumulate(jnp.where(row_ids < rows, wse, 0.0))

        @pl.when(jnp.logical_not(is_ragged))
        def _():
            _accumulate(wse)
    else:
        _accumulate(wse)


def weighted_mse_loss(inp, target, weight_for_white=10.0, *,
                      block_rows=4096, num_splits=1, core_parallel=False,
                      vmem_limit_bytes=None):
    """Pallas implementation of WeightedMSELoss.forward -> scalar float32."""
    assert inp.shape == target.shape, "input/target must have identical shapes"
    n_elems = inp.size
    wfw = float(weight_for_white)

    x_flat = inp.reshape(-1)
    t_flat = target.reshape(-1)

    rows = n_elems // _LANE
    aligned = rows * _LANE

    # <128-element tail handled in plain JAX (negligible); never jnp.pad the
    # full arrays.
    if aligned != n_elems:
        tx = x_flat[aligned:].astype(jnp.float32)
        tt = t_flat[aligned:].astype(jnp.float32)
        tail_sum = jnp.sum((tx - tt) ** 2 * (1.0 + tt * (wfw - 1.0)))
    else:
        tail_sum = jnp.float32(0.0)

    if rows == 0:
        # Everything fits in the tail path.
        return tail_sum / float(n_elems)

    if aligned != n_elems:
        x = x_flat[:aligned].reshape(rows, _LANE)
        t = t_flat[:aligned].reshape(rows, _LANE)
    else:
        x = x_flat.reshape(rows, _LANE)
        t = t_flat.reshape(rows, _LANE)

    # Clamp the tile to the data size; keep it a multiple of 16 rows so the
    # same code path works for f32 and bf16 inputs.
    rows_rounded = ((rows + _SUB - 1) // _SUB) * _SUB
    br = int(min(block_rows, rows_rounded))
    br = max(_SUB, (br // _SUB) * _SUB)

    num_blocks = pl.cdiv(rows, br)
    blocks_per_split = pl.cdiv(num_blocks, num_splits)
    # Only emit mask code if some block's logical extent crosses `rows`
    # (ragged last block or clamped-duplicate blocks).
    may_need_mask = (num_splits * blocks_per_split * br) != rows

    def in_map(c, i):
        # Clamp fully out-of-range logical blocks onto the last valid block so
        # every DMA stays in bounds; their rows are zeroed in the kernel.
        return (jnp.minimum(c * blocks_per_split + i, num_blocks - 1), 0)

    kernel = functools.partial(
        _wmse_kernel,
        weight_for_white=wfw,
        block_rows=br,
        rows=rows,
        blocks_per_split=blocks_per_split,
        may_need_mask=may_need_mask,
    )

    if core_parallel and num_splits > 1:
        split_sem = pltpu.CORE_PARALLEL  # actually shard across TCs on v7x
    else:
        split_sem = "parallel"
    cp_kwargs = dict(dimension_semantics=(split_sem, "arbitrary"))
    if vmem_limit_bytes is not None:
        cp_kwargs["vmem_limit_bytes"] = int(vmem_limit_bytes)

    partials = pl.pallas_call(
        kernel,
        out_shape=jax.ShapeDtypeStruct((num_splits, 8, _LANE), jnp.float32),
        grid_spec=pltpu.PrefetchScalarGridSpec(
            num_scalar_prefetch=0,
            grid=(num_splits, blocks_per_split),
            in_specs=[
                pl.BlockSpec((br, _LANE), in_map),
                pl.BlockSpec((br, _LANE), in_map),
            ],
            out_specs=pl.BlockSpec((None, 8, _LANE), lambda c, i: (c, 0, 0)),
        ),
        compiler_params=pltpu.CompilerParams(**cp_kwargs),
    )(x, t)

    # Single cheap cross-lane/split reduction + mean (true element count).
    return (jnp.sum(partials) + tail_sum) / float(n_elems)


def _reference(inp, target, weight_for_white=10.0):
    weights = jnp.ones_like(target) + target * (weight_for_white - 1.0)
    squared_error = (inp - target) ** 2
    return jnp.mean(squared_error * weights)


if __name__ == "__main__":
    key = jax.random.PRNGKey(0)
    keys = jax.random.split(key, 8)

    checks = []

    # Small NCHW shape (lane-aligned element count), single block.
    shape1 = (2, 4, 16, 16)
    inp1 = jax.random.uniform(keys[0], shape1, dtype=jnp.float32)
    tgt1 = (jax.random.uniform(keys[1], shape1) > 0.5).astype(jnp.float32)
    checks.append((inp1, tgt1, {}))

    # Row count not a multiple of the tile + 2-way split -> exercises the
    # pl.when-gated mask and the clamped-duplicate block path.
    shape2 = (2, 3, 16, 16)
    inp2 = jax.random.uniform(keys[2], shape2, dtype=jnp.float32)
    tgt2 = (jax.random.uniform(keys[3], shape2) > 0.5).astype(jnp.float32)
    checks.append((inp2, tgt2, {"block_rows": 16, "num_splits": 2}))

    # Multi-step accumulation along the reduction axis (forced small tile).
    shape3 = (2, 4, 32, 32)
    inp3 = jax.random.uniform(keys[4], shape3, dtype=jnp.float32)
    tgt3 = (jax.random.uniform(keys[5], shape3) > 0.5).astype(jnp.float32)
    checks.append((inp3, tgt3, {"block_rows": 16}))

    # Element count NOT a multiple of 128 -> exercises the plain-JAX tail path
    # (no jnp.pad of the full arrays anywhere).
    shape4 = (2, 3, 15, 17)
    inp4 = jax.random.uniform(keys[6], shape4, dtype=jnp.float32)
    tgt4 = (jax.random.uniform(keys[7], shape4) > 0.5).astype(jnp.float32)
    checks.append((inp4, tgt4, {"block_rows": 16}))

    for a, b, kw in checks:
        loss = weighted_mse_loss(a, b, weight_for_white=10.0, **kw)
        loss = jax.block_until_ready(loss)
        ref = _reference(a, b, weight_for_white=10.0)
        assert jnp.allclose(loss, ref, rtol=1e-5, atol=1e-6), (kw, loss, ref)

    print("KERNEL_OK")
</pallas_src>

<mosaic_0001>
module attributes {stable_mosaic.version = 11 : i64} {
  func.func @_wmse_kernel(%arg0: i32, %arg1: i32, %arg2: memref<16x128xf32, #tpu.memory_space<vmem>>, %arg3: memref<16x128xf32, #tpu.memory_space<vmem>>, %arg4: memref<1x8x128xf32, #tpu.memory_space<vmem>>) attributes {dimension_semantics = [#tpu.dimension_semantics<parallel>, #tpu.dimension_semantics<arbitrary>], iteration_bounds = array<i64: 1, 1>, scalar_prefetch = 0 : i64, scratch_operands = 0 : i64, tpu.core_type = #tpu.core_type<tc>, window_params = [{transform_indices = @transform_0, window_bounds = array<i64: 16, 128>}, {transform_indices = @transform_1, window_bounds = array<i64: 16, 128>}, {transform_indices = @transform_2, window_bounds = array<i64: 1, 8, 128>}]} {
    %c0_i32 = arith.constant 0 : i32
    %0 = arith.cmpi eq, %arg1, %c0_i32 : i32
    %1 = arith.extui %0 : i1 to i32
    %c0_i32_0 = arith.constant 0 : i32
    %2 = arith.cmpi ne, %1, %c0_i32_0 : i32
    scf.if %2 {
      %cst_12 = arith.constant 0.000000e+00 : f32
      %20 = vector.broadcast %cst_12 : f32 to vector<8x128xf32>
      %c0_13 = arith.constant 0 : index
      %c0_14 = arith.constant 0 : index
      %c0_15 = arith.constant 0 : index
      %21 = vector.load %arg4[%c0_13, %c0_14, %c0_15] : memref<1x8x128xf32, #tpu.memory_space<vmem>>, vector<1x8x128xf32>
      %22 = vector.shape_cast %21 : vector<1x8x128xf32> to vector<8x128xf32>
      %23 = vector.shape_cast %20 : vector<8x128xf32> to vector<1x8x128xf32>
      tpu.vector_store %arg4[%c0_13, %c0_14, %c0_15], %23 {strides = array<i32>} : memref<1x8x128xf32, #tpu.memory_space<vmem>>, vector<1x8x128xf32>,
    } else {
    }
    %c0 = arith.constant 0 : index
    %c0_1 = arith.constant 0 : index
    %3 = vector.load %arg2[%c0, %c0_1] : memref<16x128xf32, #tpu.memory_space<vmem>>, vector<16x128xf32>
    %c0_2 = arith.constant 0 : index
    %c0_3 = arith.constant 0 : index
    %4 = vector.load %arg3[%c0_2, %c0_3] : memref<16x128xf32, #tpu.memory_space<vmem>>, vector<16x128xf32>
    %cst = arith.constant 9.000000e+00 : f32
    %5 = vector.broadcast %cst : f32 to vector<16x128xf32>
    %6 = arith.mulf %4, %5 : vector<16x128xf32>
    %cst_4 = arith.constant 1.000000e+00 : f32
    %7 = vector.broadcast %cst_4 : f32 to vector<16x128xf32>
    %8 = arith.addf %7, %6 : vector<16x128xf32>
    %9 = arith.subf %3, %4 : vector<16x128xf32>
    %10 = arith.mulf %9, %9 : vector<16x128xf32>
    %11 = arith.mulf %10, %8 : vector<16x128xf32>
    %c0_5 = arith.constant 0 : index
    %c0_6 = arith.constant 0 : index
    %c0_7 = arith.constant 0 : index
    %12 = vector.load %arg4[%c0_5, %c0_6, %c0_7] : memref<1x8x128xf32, #tpu.memory_space<vmem>>, vector<1x8x128xf32>
    %13 = vector.shape_cast %12 : vector<1x8x128xf32> to vector<8x128xf32>
    %14 = vector.shape_cast %11 : vector<16x128xf32> to vector<2x8x128xf32>
    %cst_8 = arith.constant dense<0.000000e+00> : vector<8x128xf32>
    %15 = vector.multi_reduction <add>, %14, %cst_8 [0] : vector<2x8x128xf32> to vector<8x128xf32>
    %16 = arith.addf %13, %15 : vector<8x128xf32>
    %c0_9 = arith.constant 0 : index
    %c0_10 = arith.constant 0 : index
    %c0_11 = arith.constant 0 : index
    %17 = vector.load %arg4[%c0_9, %c0_10, %c0_11] : memref<1x8x128xf32, #tpu.memory_space<vmem>>, vector<1x8x128xf32>
    %18 = vector.shape_cast %17 : vector<1x8x128xf32> to vector<8x128xf32>
    %19 = vector.shape_cast %16 : vector<8x128xf32> to vector<1x8x128xf32>
    tpu.vector_store %arg4[%c0_9, %c0_10, %c0_11], %19 {strides = array<i32>} : memref<1x8x128xf32, #tpu.memory_space<vmem>>, vector<1x8x128xf32>,
    return
  }
  func.func @transform_0(%arg0: i32, %arg1: i32) -> (i32, i32) {
    %c1_i32 = arith.constant 1 : i32
    %0 = arith.muli %arg0, %c1_i32 : i32
    %1 = arith.addi %0, %arg1 : i32
    %c0_i32 = arith.constant 0 : i32
    %2 = arith.minsi %1, %c0_i32 : i32
    %c0_i32_0 = arith.constant 0 : i32
    %c0_i32_1 = arith.constant 0 : i32
    return %2, %c0_i32_0 : i32, i32
  }
  func.func @transform_1(%arg0: i32, %arg1: i32) -> (i32, i32) {
    %c1_i32 = arith.constant 1 : i32
    %0 = arith.muli %arg0, %c1_i32 : i32
    %1 = arith.addi %0, %arg1 : i32
    %c0_i32 = arith.constant 0 : i32
    %2 = arith.minsi %1, %c0_i32 : i32
    %c0_i32_0 = arith.constant 0 : i32
    %c0_i32_1 = arith.constant 0 : i32
    return %2, %c0_i32_0 : i32, i32
  }
  func.func @transform_2(%arg0: i32, %arg1: i32) -> (i32, i32, i32) {
    %c0_i32 = arith.constant 0 : i32
    %c0_i32_0 = arith.constant 0 : i32
    %c0_i32_1 = arith.constant 0 : i32
    return %arg0, %c0_i32, %c0_i32_0 : i32, i32, i32
  }
}

</mosaic_0001>

<llo_original>
// kernel: tpu_custom_call.1
$region0: #{tpu_custom_call.1}
  #allocation0 [shape = 'u32[]', space=smem, size = 0x4, offset = 0x4, fixed_abs, tag = 'smem constant byte address 0x4 - core index']
  #allocation1 [shape = 'u32[72,128]{1,0:T(1,128)}', space=vmem, size = 0x9000, scoped, tag = 'internal scratch']
  %s0 = inlined_call_operand.hbm [shape: f32[16,128], index: 0, kind: input, shape index: {}]
  %s1 = inlined_call_operand.hbm [shape: f32[16,128], index: 1, kind: input, shape index: {}]
  %s2 = inlined_call_operand.hbm [shape: f32[1,8,128], index: 2, kind: output, shape index: {}]
  %s3 = sld [smem:[#allocation0]]
  $region30: #{tpu_custom_call.1} parent=0
    _
  %s5 = ssub.s32 1, %s3
  %s6 = scalar_select 0, %s5, %s3
  $region1: #{tpu_custom_call.1} parent=0
    #allocation2 [shape = 'u8[8192]{0}', space=vmem, size = 0x2000, scoped, tag = 'input window, operand 0, single buffered']
    #allocation3 [shape = 's32[1]{0}', space=sflag, size = 0x4, scoped, tag = 'scoped memory for tpu_custom_call.1']
    #allocation4 [shape = 's32[1]{0}', space=sflag, size = 0x4, scoped, tag = 'scoped memory for tpu_custom_call.1']
    #allocation5 [shape = 'u8[8192]{0}', space=vmem, size = 0x2000, scoped, tag = 'input window, operand 1, single buffered']
    #allocation6 [shape = 's32[1]{0}', space=sflag, size = 0x4, scoped, tag = 'scoped memory for tpu_custom_call.1']
    #allocation7 [shape = 'u8[4096]{0}', space=vmem, size = 0x1000, scoped, tag = 'output window, operand 0, single buffered']
    %7 = vsyncpa [#allocation3], 0
    %8 = vsyncpa [#allocation6], 0
    %9 = vsyncpa [#allocation4], 0
    // Predicated region
    $region2: #{tpu_custom_call.1} parent=1 // pred_check
      _
    $region3: #{tpu_custom_call.1} parent=1 // pred_check_branch
      %11 = sbr.rel (0) target = $region5
    $region4: #{tpu_custom_call.1} parent=1 // pred_region
      %s12 = sadd.s32 0, 0
      %p13 = scmp.lt.s32.totalorder %s12, 0
      %s14 = scalar_select %p13, %s12, 0
      %s15 = smul.u32 2, %s14
      %17 = vsyncadd [#allocation3], 0
      %s18 = smul.addr %s15, 8
      %s19 = scalar_lea.hbm %s0, %s18
      %s20 = sshll.u32 %s19, 4
      %s21 = int_to_ptr.hbm [resolvable:$true] %s20
      %s22 = sshll.u32 [#allocation2], 4
      %s23 = int_to_ptr.vmem [resolvable:$true] %s22
      %28 = dma.hbm_to_vmem [thread:$0]  %s21, 256, %s23, [#allocation3], 128, 128, 8
    $region5: #{tpu_custom_call.1} parent=1 // pred_fallthru
      _
    // Predicated region
    $region6: #{tpu_custom_call.1} parent=1 // pred_check
      _
    $region7: #{tpu_custom_call.1} parent=1 // pred_check_branch
      %30 = sbr.rel (0) target = $region9
    $region8: #{tpu_custom_call.1} parent=1 // pred_region
      %s31 = sadd.s32 0, 0
      %p32 = scmp.lt.s32.totalorder %s31, 0
      %s33 = scalar_select %p32, %s31, 0
      %s34 = smul.u32 2, %s33
      %36 = vsyncadd [#allocation6], 0
      %s37 = smul.addr %s34, 8
      %s38 = scalar_lea.hbm %s1, %s37
      %s39 = sshll.u32 %s38, 4
      %s40 = int_to_ptr.hbm [resolvable:$true] %s39
      %s41 = sshll.u32 [#allocation5], 4
      %s42 = int_to_ptr.vmem [resolvable:$true] %s41
      %47 = dma.hbm_to_vmem [thread:$0]  %s40, 256, %s42, [#allocation6], 128, 128, 8
    $region9: #{tpu_custom_call.1} parent=1 // pred_fallthru
      _
    // Predicated region
    $region10: #{tpu_custom_call.1} parent=1 // pred_check
      _
    $region11: #{tpu_custom_call.1} parent=1 // pred_check_branch
      %49 = sbr.rel (0) target = $region13
    $region12: #{tpu_custom_call.1} parent=1 // pred_region
      %51 = dma.done [#allocation3], 256
    $region13: #{tpu_custom_call.1} parent=1 // pred_fallthru
      _
    // Predicated region
    $region14: #{tpu_custom_call.1} parent=1 // pred_check
      _
    $region15: #{tpu_custom_call.1} parent=1 // pred_check_branch
      %53 = sbr.rel (0) target = $region17
    $region16: #{tpu_custom_call.1} parent=1 // pred_region
      %55 = dma.done [#allocation6], 256
    $region17: #{tpu_custom_call.1} parent=1 // pred_fallthru
      _
    %s56 = sadd.s32 0, 0
    %p57 = scmp.lt.s32.totalorder %s56, 0
    %s58 = scalar_select %p57, %s56, 0
    %s59 = smul.u32 2, %s58
    %s60 = sadd.s32 0, 0
    %p61 = scmp.lt.s32.totalorder %s60, 0
    %s62 = scalar_select %p61, %s60, 0
    %s63 = smul.u32 2, %s62
    %p64 = scmp.eq.s32.totalorder 0, 0
    // Predicated region
    $region18: #{tpu_custom_call.1} parent=1 // pred_check
      %p65 = pneg %p64
    $region19: #{tpu_custom_call.1} parent=1 // pred_check_branch
      %67 = sbr.rel (%p65) target = $region21
    $region20: #{tpu_custom_call.1} parent=1 // pred_region
      %68 = vst [vmem:[#allocation7] sm:$0xff] 0.0
    $region21: #{tpu_custom_call.1} parent=1 // pred_fallthru
      _
    %v69 = vld [vmem:[#allocation2] sm:$0xff]
    %v70 = vld [vmem:[#allocation2 + $0x8] sm:$0xff]
    %v71 = vld [vmem:[#allocation5] sm:$0xff]
    %v72 = vld [vmem:[#allocation5 + $0x8] sm:$0xff]
    %v73 = vmul.f32 %v71, 9.0
    %v74 = vmul.f32 %v72, 9.0
    %v75 = vadd.f32 %v73, 1.0
    %v76 = vadd.f32 %v74, 1.0
    %v77 = vsub.f32 %v69, %v71
    %v78 = vsub.f32 %v70, %v72
    %v79 = vmul.f32 %v77, %v77
    %v80 = vmul.f32 %v78, %v78
    %v81 = vmul.f32 %v79, %v75
    %v82 = vmul.f32 %v80, %v76
    %v83 = vld [vmem:[#allocation7] sm:$0xff]
    %v84 = vadd.f32 %v81, %v82
    %v85 = vadd.f32 %v83, %v84
    %86 = vst [vmem:[#allocation7] sm:$0xff] %v85
    // Predicated region
    $region22: #{tpu_custom_call.1} parent=1 // pred_check
      _
    $region23: #{tpu_custom_call.1} parent=1 // pred_check_branch
      %88 = sbr.rel (0) target = $region25
    $region24: #{tpu_custom_call.1} parent=1 // pred_region
      %90 = vsyncadd [#allocation4], 0
      %s92 = sshll.u32 [#allocation7], 4
      %s93 = int_to_ptr.vmem [resolvable:$true] %s92
      %s94 = sshll.u32 %s2, 4
      %s95 = int_to_ptr.hbm [resolvable:$true] %s94
      %97 = dma.vmem_to_hbm [thread:$0]  %s93, 128, %s95, [#allocation4]
    $region25: #{tpu_custom_call.1} parent=1 // pred_fallthru
      _
    // Predicated region
    $region26: #{tpu_custom_call.1} parent=1 // pred_check
      _
    $region27: #{tpu_custom_call.1} parent=1 // pred_check_branch
      %99 = sbr.rel (0) target = $region29
    $region28: #{tpu_custom_call.1} parent=1 // pred_region
      %101 = dma.done [#allocation4], 128
    $region29: #{tpu_custom_call.1} parent=1 // pred_fallthru
      _
    %102 = vsyncpa [#allocation3], 1
    %103 = vsyncpa [#allocation6], 1
    %104 = vsyncpa [#allocation4], 1

</llo_original>
